<compile_context>
chip_gen: v7x
topology: tpu7x:2x2x1
jax: 0.10.0
libtpu: 0.0.40
codegen_flags: <defaults>
</compile_context>

<pallas_src>
import functools

import jax
import jax.numpy as jnp
from jax.experimental import pallas as pl
from jax.experimental.pallas import tpu as pltpu

EPS = 1e-3


def _conv_bn_relu_kernel(pt_ref, w_ref, gamma_ref, beta_ref, o_ref, *,
                         inv_count, eps):
    # pt_ref    : (K, r_pad)     transposed im2col patches (zero in padded cols)
    # w_ref     : (Cout, K)      conv weights, (o, dh, dw, cin) flattened
    # gamma_ref : (Cout, 1)
    # beta_ref  : (Cout, 1)
    # o_ref     : (Cout, r_pad)  lane-dense fused output
    y = jnp.dot(w_ref[...], pt_ref[...],
                preferred_element_type=jnp.float32)            # (Cout, r_pad) f32
    # Train-mode batch statistics.  Padded columns of pt_ref are zero, so their
    # conv output is exactly 0 and contributes nothing to sum / sum-of-squares;
    # inv_count = 1 / (true R), so mean/var are exact.
    s = jnp.sum(y, axis=1, keepdims=True)                      # (Cout, 1)
    ss = jnp.sum(y * y, axis=1, keepdims=True)                 # (Cout, 1)
    mean = s * inv_count
    var = ss * inv_count - mean * mean                         # biased variance
    inv = jax.lax.rsqrt(var + eps)
    scale = gamma_ref[...] * inv
    shift = beta_ref[...] - mean * scale
    o_ref[...] = jnp.maximum(y * scale + shift, 0.0)


def conv_bn_relu(x_nchw, weight_oihw, gamma, beta, *, matmul_dtype=jnp.float32):
    """x_nchw: (N, Cin, H, W) f32; weight_oihw: (Cout, Cin, 3, 3); gamma/beta: (Cout,).
    Returns (N, Cout, H, W) f32 = relu(batchnorm_train(conv(x)))."""
    N, Cin, H, W = x_nchw.shape
    Cout, _, KH, KW = weight_oihw.shape
    R = N * H * W
    K = KH * KW * Cin
    r_pad = pl.cdiv(R, 128) * 128                               # lane-aligned R

    # --- glue: channel-first, zero-pad, transposed im2col (K, R) --------------
    # Keeping R as the minor dim makes every kernel load/store full-lane.
    x_cf = jnp.transpose(x_nchw, (1, 0, 2, 3))                  # (Cin, N, H, W)
    xp = jnp.pad(x_cf, ((0, 0), (0, 0), (1, 1), (1, 1)))        # (Cin, N, H+2, W+2)
    rows = []
    for dh in range(KH):
        for dw in range(KW):
            rows.append(xp[:, :, dh:dh + H, dw:dw + W].reshape(Cin, R))
    patches_t = jnp.concatenate(rows, axis=0)                   # (K, R)
    patches_t = jnp.pad(patches_t, ((0, 0), (0, r_pad - R))).astype(matmul_dtype)

    # weight (Cout,Cin,KH,KW) -> (Cout,KH,KW,Cin) -> (Cout,K); matches the
    # (dh, dw, cin) row ordering of patches_t.
    w_t = jnp.transpose(weight_oihw, (0, 2, 3, 1)).reshape(Cout, K).astype(matmul_dtype)
    gamma2 = gamma.reshape(Cout, 1).astype(jnp.float32)
    beta2 = beta.reshape(Cout, 1).astype(jnp.float32)

    # --- single fused kernel: conv matmul + BN stats + BN + ReLU --------------
    out_t = pl.pallas_call(
        functools.partial(_conv_bn_relu_kernel, inv_count=1.0 / R, eps=EPS),
        out_shape=jax.ShapeDtypeStruct((Cout, r_pad), jnp.float32),
        grid=(1,),
        in_specs=[
            pl.BlockSpec((K, r_pad), lambda i: (0, 0)),
            pl.BlockSpec((Cout, K), lambda i: (0, 0)),
            pl.BlockSpec((Cout, 1), lambda i: (0, 0)),
            pl.BlockSpec((Cout, 1), lambda i: (0, 0)),
        ],
        out_specs=pl.BlockSpec((Cout, r_pad), lambda i: (0, 0)),
        compiler_params=pltpu.CompilerParams(
            dimension_semantics=("arbitrary",)),
    )(patches_t, w_t, gamma2, beta2)

    # --- glue: back to NCHW ----------------------------------------------------
    out_t = out_t[:, :R].reshape(Cout, N, H, W)
    return jnp.transpose(out_t, (1, 0, 2, 3))


def _reference(x_nchw, weight_oihw, gamma, beta):
    """Pure-JAX reference (lax.conv + train-mode BN + ReLU) for verification."""
    y = jax.lax.conv_general_dilated(
        x_nchw, weight_oihw, window_strides=(1, 1), padding=((1, 1), (1, 1)),
        dimension_numbers=("NCHW", "OIHW", "NCHW"))
    mean = jnp.mean(y, axis=(0, 2, 3), keepdims=True)
    var = jnp.mean(jnp.square(y - mean), axis=(0, 2, 3), keepdims=True)
    y_hat = (y - mean) * jax.lax.rsqrt(var + EPS)
    y_hat = y_hat * gamma.reshape(1, -1, 1, 1) + beta.reshape(1, -1, 1, 1)
    return jnp.maximum(y_hat, 0.0)


if __name__ == "__main__":
    key = jax.random.PRNGKey(0)
    kx, kw, kg, kb = jax.random.split(key, 4)

    # Shapes implied by the module: Conv2d(16 -> 32, 3x3, pad 1) on (1, 16, 28, 28).
    N, Cin, H, W, Cout = 1, 16, 28, 28, 32
    x = jax.random.normal(kx, (N, Cin, H, W), dtype=jnp.float32)
    # Deterministic synthetic parameters (not a checkpoint load).
    weight = 0.1 * jax.random.normal(kw, (Cout, Cin, 3, 3), dtype=jnp.float32)
    gamma = 1.0 + 0.1 * jax.random.normal(kg, (Cout,), dtype=jnp.float32)
    beta = 0.1 * jax.random.normal(kb, (Cout,), dtype=jnp.float32)

    fn = jax.jit(conv_bn_relu)
    out = jax.block_until_ready(fn(x, weight, gamma, beta))

    ref = jax.block_until_ready(_reference(x, weight, gamma, beta))
    assert out.shape == (N, Cout, H, W), out.shape
    max_err = float(jnp.max(jnp.abs(out - ref)))
    assert jnp.allclose(out, ref, atol=1e-3, rtol=1e-3), max_err

    print("KERNEL_OK")
</pallas_src>

<mosaic_0001>
module attributes {stable_mosaic.version = 11 : i64} {
  func.func @_conv_bn_relu_kernel(%arg0: i32, %arg1: memref<144x896xf32, #tpu.memory_space<vmem>>, %arg2: memref<32x144xf32, #tpu.memory_space<vmem>>, %arg3: memref<32x1xf32, #tpu.memory_space<vmem>>, %arg4: memref<32x1xf32, #tpu.memory_space<vmem>>, %arg5: memref<32x896xf32, #tpu.memory_space<vmem>>) attributes {dimension_semantics = [#tpu.dimension_semantics<arbitrary>], iteration_bounds = array<i64: 1>, scalar_prefetch = 0 : i64, scratch_operands = 0 : i64, tpu.core_type = #tpu.core_type<tc>, window_params = [{pipeline_mode = #tpu.pipeline_mode<synchronous>, transform_indices = @transform_0, window_bounds = array<i64: 144, 896>}, {pipeline_mode = #tpu.pipeline_mode<synchronous>, transform_indices = @transform_1, window_bounds = array<i64: 32, 144>}, {pipeline_mode = #tpu.pipeline_mode<synchronous>, transform_indices = @transform_2, window_bounds = array<i64: 32, 1>}, {pipeline_mode = #tpu.pipeline_mode<synchronous>, transform_indices = @transform_3, window_bounds = array<i64: 32, 1>}, {pipeline_mode = #tpu.pipeline_mode<synchronous>, transform_indices = @transform_4, window_bounds = array<i64: 32, 896>}]} {
    %c0 = arith.constant 0 : index
    %c0_0 = arith.constant 0 : index
    %0 = vector.load %arg2[%c0, %c0_0] : memref<32x144xf32, #tpu.memory_space<vmem>>, vector<32x144xf32>
    %c0_1 = arith.constant 0 : index
    %c0_2 = arith.constant 0 : index
    %1 = vector.load %arg1[%c0_1, %c0_2] : memref<144x896xf32, #tpu.memory_space<vmem>>, vector<144x896xf32>
    %cst = arith.constant dense<0.000000e+00> : vector<32x896xf32>
    %2 = tpu.matmul %0, %1, %cst {dimension_numbers = #tpu.dot_dimension_numbers<[1], [0], [0], [1], [0, 0, 1, 1], [], []>} : vector<32x144xf32>, vector<144x896xf32>, vector<32x896xf32> -> vector<32x896xf32>
    %cst_3 = arith.constant dense<0.000000e+00> : vector<32xf32>
    %3 = vector.multi_reduction <add>, %2, %cst_3 [1] : vector<32x896xf32> to vector<32xf32>
    %4 = vector.shape_cast %3 : vector<32xf32> to vector<32x1xf32>
    %5 = arith.mulf %2, %2 : vector<32x896xf32>
    %cst_4 = arith.constant dense<0.000000e+00> : vector<32xf32>
    %6 = vector.multi_reduction <add>, %5, %cst_4 [1] : vector<32x896xf32> to vector<32xf32>
    %7 = vector.shape_cast %6 : vector<32xf32> to vector<32x1xf32>
    %cst_5 = arith.constant 0.00127551018 : f32
    %8 = vector.broadcast %cst_5 : f32 to vector<32x1xf32>
    %9 = arith.mulf %4, %8 : vector<32x1xf32>
    %cst_6 = arith.constant 0.00127551018 : f32
    %10 = vector.broadcast %cst_6 : f32 to vector<32x1xf32>
    %11 = arith.mulf %7, %10 : vector<32x1xf32>
    %12 = arith.mulf %9, %9 : vector<32x1xf32>
    %13 = arith.subf %11, %12 : vector<32x1xf32>
    %cst_7 = arith.constant 1.000000e-03 : f32
    %14 = vector.broadcast %cst_7 : f32 to vector<32x1xf32>
    %15 = arith.addf %13, %14 : vector<32x1xf32>
    %16 = math.rsqrt %15 : vector<32x1xf32>
    %c0_8 = arith.constant 0 : index
    %c0_9 = arith.constant 0 : index
    %17 = vector.load %arg3[%c0_8, %c0_9] : memref<32x1xf32, #tpu.memory_space<vmem>>, vector<32x1xf32>
    %18 = arith.mulf %17, %16 : vector<32x1xf32>
    %c0_10 = arith.constant 0 : index
    %c0_11 = arith.constant 0 : index
    %19 = vector.load %arg4[%c0_10, %c0_11] : memref<32x1xf32, #tpu.memory_space<vmem>>, vector<32x1xf32>
    %20 = arith.mulf %9, %18 : vector<32x1xf32>
    %21 = arith.subf %19, %20 : vector<32x1xf32>
    %22 = vector.broadcast %18 : vector<32x1xf32> to vector<32x896xf32>
    %23 = arith.mulf %2, %22 : vector<32x896xf32>
    %24 = vector.broadcast %21 : vector<32x1xf32> to vector<32x896xf32>
    %25 = arith.addf %23, %24 : vector<32x896xf32>
    %cst_12 = arith.constant 0.000000e+00 : f32
    %26 = vector.broadcast %cst_12 : f32 to vector<32x896xf32>
    %27 = arith.maximumf %25, %26 : vector<32x896xf32>
    %c0_13 = arith.constant 0 : index
    %c0_14 = arith.constant 0 : index
    %28 = vector.load %arg5[%c0_13, %c0_14] : memref<32x896xf32, #tpu.memory_space<vmem>>, vector<32x896xf32>
    tpu.vector_store %arg5[%c0_13, %c0_14], %27 {strides = array<i32>} : memref<32x896xf32, #tpu.memory_space<vmem>>, vector<32x896xf32>,
    return
  }
  func.func @transform_0(%arg0: i32) -> (i32, i32) {
    %c0_i32 = arith.constant 0 : i32
    %c0_i32_0 = arith.constant 0 : i32
    %c0_i32_1 = arith.constant 0 : i32
    return %c0_i32, %c0_i32_0 : i32, i32
  }
  func.func @transform_1(%arg0: i32) -> (i32, i32) {
    %c0_i32 = arith.constant 0 : i32
    %c0_i32_0 = arith.constant 0 : i32
    %c0_i32_1 = arith.constant 0 : i32
    return %c0_i32, %c0_i32_0 : i32, i32
  }
  func.func @transform_2(%arg0: i32) -> (i32, i32) {
    %c0_i32 = arith.constant 0 : i32
    %c0_i32_0 = arith.constant 0 : i32
    %c0_i32_1 = arith.constant 0 : i32
    return %c0_i32, %c0_i32_0 : i32, i32
  }
  func.func @transform_3(%arg0: i32) -> (i32, i32) {
    %c0_i32 = arith.constant 0 : i32
    %c0_i32_0 = arith.constant 0 : i32
    %c0_i32_1 = arith.constant 0 : i32
    return %c0_i32, %c0_i32_0 : i32, i32
  }
  func.func @transform_4(%arg0: i32) -> (i32, i32) {
    %c0_i32 = arith.constant 0 : i32
    %c0_i32_0 = arith.constant 0 : i32
    %c0_i32_1 = arith.constant 0 : i32
    return %c0_i32, %c0_i32_0 : i32, i32
  }
}

</mosaic_0001>

<llo_original>
// kernel: conv_bn_relu.1
$region0: #{conv_bn_relu.1}
  #allocation0 [shape = 'u32[]', space=smem, size = 0x4, offset = 0x4, fixed_abs, tag = 'smem constant byte address 0x4 - core index']
  #allocation1 [shape = 'u32[144,128]{1,0:T(1,128)}', space=vmem, size = 0x12000, scoped, tag = 'internal scratch']
  %s0 = inlined_call_operand.vmem [shape: f32[144,896], index: 0, kind: input, shape index: {}]
  %s1 = inlined_call_operand.vmem [shape: f32[32,144], index: 1, kind: input, shape index: {}]
  %s2 = inlined_call_operand.vmem [shape: f32[32,1], index: 2, kind: input, shape index: {}]
  %s3 = inlined_call_operand.vmem [shape: f32[32,1], index: 3, kind: input, shape index: {}]
  %s4 = inlined_call_operand.vmem [shape: f32[32,896], index: 4, kind: output, shape index: {}]
  %s5 = sld [smem:[#allocation0]]
  $region26: #{conv_bn_relu.1} parent=0
    _
  %s7 = ssub.s32 1, %s5
  %s8 = scalar_select 0, %s7, %s5
  // Predicated region
  $region2: #{conv_bn_relu.1} parent=0 // pred_check
    _
  $region3: #{conv_bn_relu.1} parent=0 // pred_check_branch
    %10 = sbr.rel (0) target = $region5
  $region4: #{conv_bn_relu.1} parent=0 // pred_region
    _
  $region5: #{conv_bn_relu.1} parent=0 // pred_fallthru
    _
  // Predicated region
  $region6: #{conv_bn_relu.1} parent=0 // pred_check
    _
  $region7: #{conv_bn_relu.1} parent=0 // pred_check_branch
    %12 = sbr.rel (0) target = $region9
  $region8: #{conv_bn_relu.1} parent=0 // pred_region
    _
  $region9: #{conv_bn_relu.1} parent=0 // pred_fallthru
    _
  // Predicated region
  $region10: #{conv_bn_relu.1} parent=0 // pred_check
    _
  $region11: #{conv_bn_relu.1} parent=0 // pred_check_branch
    %14 = sbr.rel (0) target = $region13
  $region12: #{conv_bn_relu.1} parent=0 // pred_region
    _
  $region13: #{conv_bn_relu.1} parent=0 // pred_fallthru
    _
  // Predicated region
  $region14: #{conv_bn_relu.1} parent=0 // pred_check
    _
  $region15: #{conv_bn_relu.1} parent=0 // pred_check_branch
    %16 = sbr.rel (0) target = $region17
  $region16: #{conv_bn_relu.1} parent=0 // pred_region
    _
  $region17: #{conv_bn_relu.1} parent=0 // pred_fallthru
    _
  %v17 = vld [vmem:[%s1] sm:$0xff]
  %v18 = vld [vmem:[%s1 + $0x8] sm:$0xff]
  %v19 = vld [vmem:[%s1 + $0x10] sm:$0xff]
  %v20 = vld [vmem:[%s1 + $0x18] sm:$0xff]
  %v21 = vld [vmem:[%s1 + $0x20] sm:$0xff]
  %v22 = vld [vmem:[%s1 + $0x28] sm:$0xff]
  %v23 = vld [vmem:[%s1 + $0x30] sm:$0xff]
  %v24 = vld [vmem:[%s1 + $0x38] sm:$0xff]
  %v25 = vld [vmem:[%s0] sm:$0xff]
  %v26 = vld [vmem:[%s0 + $0x8] sm:$0xff]
  %v27 = vld [vmem:[%s0 + $0x10] sm:$0xff]
  %v28 = vld [vmem:[%s0 + $0x18] sm:$0xff]
  %v29 = vld [vmem:[%s0 + $0x20] sm:$0xff]
  %v30 = vld [vmem:[%s0 + $0x28] sm:$0xff]
  %v31 = vld [vmem:[%s0 + $0x30] sm:$0xff]
  %v32 = vld [vmem:[%s0 + $0x38] sm:$0xff]
  %v33 = vld [vmem:[%s0 + $0x40] sm:$0xff]
  %v34 = vld [vmem:[%s0 + $0x48] sm:$0xff]
  %v35 = vld [vmem:[%s0 + $0x50] sm:$0xff]
  %v36 = vld [vmem:[%s0 + $0x58] sm:$0xff]
  %v37 = vld [vmem:[%s0 + $0x60] sm:$0xff]
  %v38 = vld [vmem:[%s0 + $0x68] sm:$0xff]
  %v39 = vld [vmem:[%s0 + $0x70] sm:$0xff]
  %v40 = vld [vmem:[%s0 + $0x78] sm:$0xff]
  %v41 = vld [vmem:[%s0 + $0x80] sm:$0xff]
  %v42 = vld [vmem:[%s0 + $0x88] sm:$0xff]
  %v43 = vld [vmem:[%s0 + $0x90] sm:$0xff]
  %v44 = vld [vmem:[%s0 + $0x98] sm:$0xff]
  %v45 = vld [vmem:[%s0 + $0xa0] sm:$0xff]
  %v46 = vld [vmem:[%s0 + $0xa8] sm:$0xff]
  %v47 = vld [vmem:[%s0 + $0xb0] sm:$0xff]
  %v48 = vld [vmem:[%s0 + $0xb8] sm:$0xff]
  %v49 = vld [vmem:[%s0 + $0xc0] sm:$0xff]
  %v50 = vld [vmem:[%s0 + $0xc8] sm:$0xff]
  %v51 = vld [vmem:[%s0 + $0xd0] sm:$0xff]
  %v52 = vld [vmem:[%s0 + $0xd8] sm:$0xff]
  %v53 = vld [vmem:[%s0 + $0xe0] sm:$0xff]
  %v54 = vld [vmem:[%s0 + $0xe8] sm:$0xff]
  %v55 = vld [vmem:[%s0 + $0xf0] sm:$0xff]
  %v56 = vld [vmem:[%s0 + $0xf8] sm:$0xff]
  %v57 = vld [vmem:[%s0 + $0x100] sm:$0xff]
  %v58 = vld [vmem:[%s0 + $0x108] sm:$0xff]
  %v59 = vld [vmem:[%s0 + $0x110] sm:$0xff]
  %v60 = vld [vmem:[%s0 + $0x118] sm:$0xff]
  %v61 = vld [vmem:[%s0 + $0x120] sm:$0xff]
  %v62 = vld [vmem:[%s0 + $0x128] sm:$0xff]
  %v63 = vld [vmem:[%s0 + $0x130] sm:$0xff]
  %v64 = vld [vmem:[%s0 + $0x138] sm:$0xff]
  %v65 = vld [vmem:[%s0 + $0x140] sm:$0xff]
  %v66 = vld [vmem:[%s0 + $0x148] sm:$0xff]
  %v67 = vld [vmem:[%s0 + $0x150] sm:$0xff]
  %v68 = vld [vmem:[%s0 + $0x158] sm:$0xff]
  %v69 = vld [vmem:[%s0 + $0x160] sm:$0xff]
  %v70 = vld [vmem:[%s0 + $0x168] sm:$0xff]
  %v71 = vld [vmem:[%s0 + $0x170] sm:$0xff]
  %v72 = vld [vmem:[%s0 + $0x178] sm:$0xff]
  %v73 = vld [vmem:[%s0 + $0x180] sm:$0xff]
  %v74 = vld [vmem:[%s0 + $0x188] sm:$0xff]
  %v75 = vld [vmem:[%s0 + $0x190] sm:$0xff]
  %v76 = vld [vmem:[%s0 + $0x198] sm:$0xff]
  %v77 = vld [vmem:[%s0 + $0x1a0] sm:$0xff]
  %v78 = vld [vmem:[%s0 + $0x1a8] sm:$0xff]
  %v79 = vld [vmem:[%s0 + $0x1b0] sm:$0xff]
  %v80 = vld [vmem:[%s0 + $0x1b8] sm:$0xff]
  %v81 = vld [vmem:[%s0 + $0x1c0] sm:$0xff]
  %v82 = vld [vmem:[%s0 + $0x1c8] sm:$0xff]
  %v83 = vld [vmem:[%s0 + $0x1d0] sm:$0xff]
  %v84 = vld [vmem:[%s0 + $0x1d8] sm:$0xff]
  %v85 = vld [vmem:[%s0 + $0x1e0] sm:$0xff]
  %v86 = vld [vmem:[%s0 + $0x1e8] sm:$0xff]
  %v87 = vld [vmem:[%s0 + $0x1f0] sm:$0xff]
  %v88 = vld [vmem:[%s0 + $0x1f8] sm:$0xff]
  %v89 = vld [vmem:[%s0 + $0x200] sm:$0xff]
  %v90 = vld [vmem:[%s0 + $0x208] sm:$0xff]
  %v91 = vld [vmem:[%s0 + $0x210] sm:$0xff]
  %v92 = vld [vmem:[%s0 + $0x218] sm:$0xff]
  %v93 = vld [vmem:[%s0 + $0x220] sm:$0xff]
  %v94 = vld [vmem:[%s0 + $0x228] sm:$0xff]
  %v95 = vld [vmem:[%s0 + $0x230] sm:$0xff]
  %v96 = vld [vmem:[%s0 + $0x238] sm:$0xff]
  %v97 = vld [vmem:[%s0 + $0x240] sm:$0xff]
  %v98 = vld [vmem:[%s0 + $0x248] sm:$0xff]
  %v99 = vld [vmem:[%s0 + $0x250] sm:$0xff]
  %v100 = vld [vmem:[%s0 + $0x258] sm:$0xff]
  %v101 = vld [vmem:[%s0 + $0x260] sm:$0xff]
  %v102 = vld [vmem:[%s0 + $0x268] sm:$0xff]
  %v103 = vld [vmem:[%s0 + $0x270] sm:$0xff]
  %v104 = vld [vmem:[%s0 + $0x278] sm:$0xff]
  %v105 = vld [vmem:[%s0 + $0x280] sm:$0xff]
  %v106 = vld [vmem:[%s0 + $0x288] sm:$0xff]
  %v107 = vld [vmem:[%s0 + $0x290] sm:$0xff]
  %v108 = vld [vmem:[%s0 + $0x298] sm:$0xff]
  %v109 = vld [vmem:[%s0 + $0x2a0] sm:$0xff]
  %v110 = vld [vmem:[%s0 + $0x2a8] sm:$0xff]
  %v111 = vld [vmem:[%s0 + $0x2b0] sm:$0xff]
  %v112 = vld [vmem:[%s0 + $0x2b8] sm:$0xff]
  %v113 = vld [vmem:[%s0 + $0x2c0] sm:$0xff]
  %v114 = vld [vmem:[%s0 + $0x2c8] sm:$0xff]
  %v115 = vld [vmem:[%s0 + $0x2d0] sm:$0xff]
  %v116 = vld [vmem:[%s0 + $0x2d8] sm:$0xff]
  %v117 = vld [vmem:[%s0 + $0x2e0] sm:$0xff]
  %v118 = vld [vmem:[%s0 + $0x2e8] sm:$0xff]
  %v119 = vld [vmem:[%s0 + $0x2f0] sm:$0xff]
  %v120 = vld [vmem:[%s0 + $0x2f8] sm:$0xff]
  %v121 = vld [vmem:[%s0 + $0x300] sm:$0xff]
  %v122 = vld [vmem:[%s0 + $0x308] sm:$0xff]
  %v123 = vld [vmem:[%s0 + $0x310] sm:$0xff]
  %v124 = vld [vmem:[%s0 + $0x318] sm:$0xff]
  %v125 = vld [vmem:[%s0 + $0x320] sm:$0xff]
  %v126 = vld [vmem:[%s0 + $0x328] sm:$0xff]
  %v127 = vld [vmem:[%s0 + $0x330] sm:$0xff]
  %v128 = vld [vmem:[%s0 + $0x338] sm:$0xff]
  %v129 = vld [vmem:[%s0 + $0x340] sm:$0xff]
  %v130 = vld [vmem:[%s0 + $0x348] sm:$0xff]
  %v131 = vld [vmem:[%s0 + $0x350] sm:$0xff]
  %v132 = vld [vmem:[%s0 + $0x358] sm:$0xff]
  %v133 = vld [vmem:[%s0 + $0x360] sm:$0xff]
  %v134 = vld [vmem:[%s0 + $0x368] sm:$0xff]
  %v135 = vld [vmem:[%s0 + $0x370] sm:$0xff]
  %v136 = vld [vmem:[%s0 + $0x378] sm:$0xff]
  %v137 = vld [vmem:[%s0 + $0x380] sm:$0xff]
  %v138 = vld [vmem:[%s0 + $0x388] sm:$0xff]
  %v139 = vld [vmem:[%s0 + $0x390] sm:$0xff]
  %v140 = vld [vmem:[%s0 + $0x398] sm:$0xff]
  %v141 = vld [vmem:[%s0 + $0x3a0] sm:$0xff]
  %v142 = vld [vmem:[%s0 + $0x3a8] sm:$0xff]
  %v143 = vld [vmem:[%s0 + $0x3b0] sm:$0xff]
  %v144 = vld [vmem:[%s0 + $0x3b8] sm:$0xff]
  %v145 = vld [vmem:[%s0 + $0x3c0] sm:$0xff]
  %v146 = vld [vmem:[%s0 + $0x3c8] sm:$0xff]
  %v147 = vld [vmem:[%s0 + $0x3d0] sm:$0xff]
  %v148 = vld [vmem:[%s0 + $0x3d8] sm:$0xff]
  %v149 = vld [vmem:[%s0 + $0x3e0] sm:$0xff]
  %v150 = vld [vmem:[%s0 + $0x3e8] sm:$0xff]
  %vm151 = vcmask 130048
  %v153 = vsel %vm151, %v18, 0
  %v156 = vsel %vm151, %v20, 0
  %v159 = vsel %vm151, %v22, 0
  %v162 = vsel %vm151, %v24, 0
  %164 = vmatprep.subr.mxu0 %v26
  %165 = vmatpush1.msra.mxu0 %v25
  %166 = vmatprep.subr.mxu0 %v33
  %167 = vmatpush1.msra.mxu0 %v32
  %168 = vmatprep.subr.mxu0 %v40
  %169 = vmatpush1.msra.mxu0 %v39
  %170 = vmatprep.subr.mxu0 %v47
  %171 = vmatpush1.msra.mxu0 %v46
  %172 = vmatprep.subr.mxu0 %v54
  %173 = vmatpush1.msra.mxu0 %v53
  %174 = vmatprep.subr.mxu0 %v61
  %175 = vmatpush1.msra.mxu0 %v60
  %176 = vmatprep.subr.mxu0 %v68
  %177 = vmatpush1.msra.mxu0 %v67
  %178 = vmatprep.subr.mxu0 %v75
  %179 = vmatpush1.msra.mxu0 %v74
  %180 = vmatprep.subr.mxu0 %v82
  %181 = vmatpush1.msra.mxu0 %v81
  %182 = vmatprep.subr.mxu0 %v89
  %183 = vmatpush1.msra.mxu0 %v88
  %184 = vmatprep.subr.mxu0 %v96
  %185 = vmatpush1.msra.mxu0 %v95
  %186 = vmatprep.subr.mxu0 %v103
  %187 = vmatpush1.msra.mxu0 %v102
  %188 = vmatprep.subr.mxu0 %v110
  %189 = vmatpush1.msra.mxu0 %v109
  %190 = vmatprep.subr.mxu0 %v117
  %191 = vmatpush1.msra.mxu0 %v116
  %192 = vmatprep.subr.mxu0 %v124
  %193 = vmatpush1.msra.mxu0 %v123
  %194 = vmatprep.subr.mxu0 %v131
  %195 = vmatpush1.msra.mxu0 %v130
  %196 = vmatprep.subr.mxu0 %v138
  %197 = vmatpush1.msra.mxu0 %v137
  %198 = vmatprep.subr.mxu0 %v145
  %199 = vmatpush1.msra.mxu0 %v144
  %200 = vmatprep.subr.mxu0 0.0
  %201 = vmatpush1.msra.mxu0 0.0
  %202 = vmatprep.subr.mxu0 0.0
  %203 = vmatpush1.msra.mxu0 0.0
  %204 = vmatprep.subr.mxu0 0.0
  %205 = vmatpush1.msra.mxu0 0.0
  %206 = vmatprep.subr.mxu0 0.0
  %207 = vmatpush1.msra.mxu0 0.0
  %208 = vmatprep.subr.mxu0 0.0
  %209 = vmatpush1.msra.mxu0 0.0
  %210 = vmatprep.subr.mxu0 0.0
  %211 = vmatpush1.msra.mxu0 0.0
  %212 = vmatprep.subr.mxu0 0.0
  %213 = vmatpush1.msra.mxu0 0.0
  %214 = vmatprep.subr.mxu0 0.0
  %215 = vmatpush1.msra.mxu0 0.0
  %216 = vmatprep.subr.mxu0 0.0
  %217 = vmatpush1.msra.mxu0 0.0
  %218 = vmatprep.subr.mxu0 0.0
  %219 = vmatpush1.msra.mxu0 0.0
  %220 = vmatprep.subr.mxu0 0.0
  %221 = vmatpush1.msra.mxu0 0.0
  %222 = vmatprep.subr.mxu0 0.0
  %223 = vmatpush1.msra.mxu0 0.0
  %224 = vmatprep.subr.mxu0 0.0
  %225 = vmatpush1.msra.mxu0 0.0
  %226 = vmatprep.subr.mxu0 0.0
  %227 = vmatpush1.msra.mxu0 0.0
  %228 = vmatprep.mubr.f32.mxu0 %v153
  %229 = vmatmul.mubr.f32.gmra.mrb[0].mxu0 %v17
  %v230 = vpop.f32.mrb[0].mxu0
  %v231 = vadd.f32 0.0, %v230
  %v232 = vpop.f32.mrb[0].mxu0
  %v233 = vadd.f32 0.0, %v232
  %234 = vmatprep.mubr.f32.mxu0 %v156
  %235 = vmatmul.mubr.f32.gmra.mrb[0].mxu0 %v19
  %v236 = vpop.f32.mrb[0].mxu0
  %v237 = vadd.f32 0.0, %v236
  %v238 = vpop.f32.mrb[0].mxu0
  %v239 = vadd.f32 0.0, %v238
  %240 = vmatprep.mubr.f32.mxu0 %v159
  %241 = vmatmul.mubr.f32.gmra.mrb[0].mxu0 %v21
  %v242 = vpop.f32.mrb[0].mxu0
  %v243 = vadd.f32 0.0, %v242
  %v244 = vpop.f32.mrb[0].mxu0
  %v245 = vadd.f32 0.0, %v244
  %246 = vmatprep.mubr.f32.mxu0 %v162
  %247 = vmatmul.mubr.f32.gmra.mrb[0].mxu0 %v23
  %v248 = vpop.f32.mrb[0].mxu0
  %v249 = vadd.f32 0.0, %v248
  %v250 = vpop.f32.mrb[0].mxu0
  %v251 = vadd.f32 0.0, %v250
  %252 = vdwg.mxu0
  %253 = vmatprep.subr.mxu0 %v28
  %254 = vmatpush1.msra.mxu0 %v27
  %255 = vmatprep.subr.mxu0 %v35
  %256 = vmatpush1.msra.mxu0 %v34
  %257 = vmatprep.subr.mxu0 %v42
  %258 = vmatpush1.msra.mxu0 %v41
  %259 = vmatprep.subr.mxu0 %v49
  %260 = vmatpush1.msra.mxu0 %v48
  %261 = vmatprep.subr.mxu0 %v56
  %262 = vmatpush1.msra.mxu0 %v55
  %263 = vmatprep.subr.mxu0 %v63
  %264 = vmatpush1.msra.mxu0 %v62
  %265 = vmatprep.subr.mxu0 %v70
  %266 = vmatpush1.msra.mxu0 %v69
  %267 = vmatprep.subr.mxu0 %v77
  %268 = vmatpush1.msra.mxu0 %v76
  %269 = vmatprep.subr.mxu0 %v84
  %270 = vmatpush1.msra.mxu0 %v83
  %271 = vmatprep.subr.mxu0 %v91
  %272 = vmatpush1.msra.mxu0 %v90
  %273 = vmatprep.subr.mxu0 %v98
  %274 = vmatpush1.msra.mxu0 %v97
  %275 = vmatprep.subr.mxu0 %v105
  %276 = vmatpush1.msra.mxu0 %v104
  %277 = vmatprep.subr.mxu0 %v112
  %278 = vmatpush1.msra.mxu0 %v111
  %279 = vmatprep.subr.mxu0 %v119
  %280 = vmatpush1.msra.mxu0 %v118
  %281 = vmatprep.subr.mxu0 %v126
  %282 = vmatpush1.msra.mxu0 %v125
  %283 = vmatprep.subr.mxu0 %v133
  %284 = vmatpush1.msra.mxu0 %v132
  %285 = vmatprep.subr.mxu0 %v140
  %286 = vmatpush1.msra.mxu0 %v139
  %287 = vmatprep.subr.mxu0 %v147
  %288 = vmatpush1.msra.mxu0 %v146
  %289 = vmatprep.subr.mxu0 0.0
  %290 = vmatpush1.msra.mxu0 0.0
  %291 = vmatprep.subr.mxu0 0.0
  %292 = vmatpush1.msra.mxu0 0.0
  %293 = vmatprep.subr.mxu0 0.0
  %294 = vmatpush1.msra.mxu0 0.0
  %295 = vmatprep.subr.mxu0 0.0
  %296 = vmatpush1.msra.mxu0 0.0
  %297 = vmatprep.subr.mxu0 0.0
  %298 = vmatpush1.msra.mxu0 0.0
  %299 = vmatprep.subr.mxu0 0.0
  %300 = vmatpush1.msra.mxu0 0.0
  %301 = vmatprep.subr.mxu0 0.0
  %302 = vmatpush1.msra.mxu0 0.0
  %303 = vmatprep.subr.mxu0 0.0
  %304 = vmatpush1.msra.mxu0 0.0
  %305 = vmatprep.subr.mxu0 0.0
  %306 = vmatpush1.msra.mxu0 0.0
  %307 = vmatprep.subr.mxu0 0.0
  %308 = vmatpush1.msra.mxu0 0.0
  %309 = vmatprep.subr.mxu0 0.0
  %310 = vmatpush1.msra.mxu0 0.0
  %311 = vmatprep.subr.mxu0 0.0
  %312 = vmatpush1.msra.mxu0 0.0
  %313 = vmatprep.subr.mxu0 0.0
  %314 = vmatpush1.msra.mxu0 0.0
  %315 = vmatprep.subr.mxu0 0.0
  %316 = vmatpush1.msra.mxu0 0.0
  %317 = vmatprep.mubr.f32.mxu0 %v153
  %318 = vmatmul.mubr.f32.gmra.mrb[0].mxu0 %v17
  %v319 = vpop.f32.mrb[0].mxu0
  %v320 = vadd.f32 0.0, %v319
  %v321 = vpop.f32.mrb[0].mxu0
  %v322 = vadd.f32 0.0, %v321
  %323 = vmatprep.mubr.f32.mxu0 %v156
  %324 = vmatmul.mubr.f32.gmra.mrb[0].mxu0 %v19
  %v325 = vpop.f32.mrb[0].mxu0
  %v326 = vadd.f32 0.0, %v325
  %v327 = vpop.f32.mrb[0].mxu0
  %v328 = vadd.f32 0.0, %v327
  %329 = vmatprep.mubr.f32.mxu0 %v159
  %330 = vmatmul.mubr.f32.gmra.mrb[0].mxu0 %v21
  %v331 = vpop.f32.mrb[0].mxu0
  %v332 = vadd.f32 0.0, %v331
  %v333 = vpop.f32.mrb[0].mxu0
  %v334 = vadd.f32 0.0, %v333
  %335 = vmatprep.mubr.f32.mxu0 %v162
  %336 = vmatmul.mubr.f32.gmra.mrb[0].mxu0 %v23
  %v337 = vpop.f32.mrb[0].mxu0
  %v338 = vadd.f32 0.0, %v337
  %v339 = vpop.f32.mrb[0].mxu0
  %v340 = vadd.f32 0.0, %v339
  %341 = vdwg.mxu0
  %342 = vmatprep.subr.mxu0 %v30
  %343 = vmatpush1.msra.mxu0 %v29
  %344 = vmatprep.subr.mxu0 %v37
  %345 = vmatpush1.msra.mxu0 %v36
  %346 = vmatprep.subr.mxu0 %v44
  %347 = vmatpush1.msra.mxu0 %v43
  %348 = vmatprep.subr.mxu0 %v51
  %349 = vmatpush1.msra.mxu0 %v50
  %350 = vmatprep.subr.mxu0 %v58
  %351 = vmatpush1.msra.mxu0 %v57
  %352 = vmatprep.subr.mxu0 %v65
  %353 = vmatpush1.msra.mxu0 %v64
  %354 = vmatprep.subr.mxu0 %v72
  %355 = vmatpush1.msra.mxu0 %v71
  %356 = vmatprep.subr.mxu0 %v79
  %357 = vmatpush1.msra.mxu0 %v78
  %358 = vmatprep.subr.mxu0 %v86
  %359 = vmatpush1.msra.mxu0 %v85
  %360 = vmatprep.subr.mxu0 %v93
  %361 = vmatpush1.msra.mxu0 %v92
  %362 = vmatprep.subr.mxu0 %v100
  %363 = vmatpush1.msra.mxu0 %v99
  %364 = vmatprep.subr.mxu0 %v107
  %365 = vmatpush1.msra.mxu0 %v106
  %366 = vmatprep.subr.mxu0 %v114
  %367 = vmatpush1.msra.mxu0 %v113
  %368 = vmatprep.subr.mxu0 %v121
  %369 = vmatpush1.msra.mxu0 %v120
  %370 = vmatprep.subr.mxu0 %v128
  %371 = vmatpush1.msra.mxu0 %v127
  %372 = vmatprep.subr.mxu0 %v135
  %373 = vmatpush1.msra.mxu0 %v134
  %374 = vmatprep.subr.mxu0 %v142
  %375 = vmatpush1.msra.mxu0 %v141
  %376 = vmatprep.subr.mxu0 %v149
  %377 = vmatpush1.msra.mxu0 %v148
  %378 = vmatprep.subr.mxu0 0.0
  %379 = vmatpush1.msra.mxu0 0.0
  %380 = vmatprep.subr.mxu0 0.0
  %381 = vmatpush1.msra.mxu0 0.0
  %382 = vmatprep.subr.mxu0 0.0
  %383 = vmatpush1.msra.mxu0 0.0
  %384 = vmatprep.subr.mxu0 0.0
  %385 = vmatpush1.msra.mxu0 0.0
  %386 = vmatprep.subr.mxu0 0.0
  %387 = vmatpush1.msra.mxu0 0.0
  %388 = vmatprep.subr.mxu0 0.0
  %389 = vmatpush1.msra.mxu0 0.0
  %390 = vmatprep.subr.mxu0 0.0
  %391 = vmatpush1.msra.mxu0 0.0
  %392 = vmatprep.subr.mxu0 0.0
  %393 = vmatpush1.msra.mxu0 0.0
  %394 = vmatprep.subr.mxu0 0.0
  %395 = vmatpush1.msra.mxu0 0.0
  %396 = vmatprep.subr.mxu0 0.0
  %397 = vmatpush1.msra.mxu0 0.0
  %398 = vmatprep.subr.mxu0 0.0
  %399 = vmatpush1.msra.mxu0 0.0
  %400 = vmatprep.subr.mxu0 0.0
  %401 = vmatpush1.msra.mxu0 0.0
  %402 = vmatprep.subr.mxu0 0.0
  %403 = vmatpush1.msra.mxu0 0.0
  %404 = vmatprep.subr.mxu0 0.0
  %405 = vmatpush1.msra.mxu0 0.0
  %406 = vmatprep.mubr.f32.mxu0 %v153
  %407 = vmatmul.mubr.f32.gmra.mrb[0].mxu0 %v17
  %v408 = vpop.f32.mrb[0].mxu0
  %v409 = vadd.f32 0.0, %v408
  %v410 = vpop.f32.mrb[0].mxu0
  %v411 = vadd.f32 0.0, %v410
  %412 = vmatprep.mubr.f32.mxu0 %v156
  %413 = vmatmul.mubr.f32.gmra.mrb[0].mxu0 %v19
  %v414 = vpop.f32.mrb[0].mxu0
  %v415 = vadd.f32 0.0, %v414
  %v416 = vpop.f32.mrb[0].mxu0
  %v417 = vadd.f32 0.0, %v416
  %418 = vmatprep.mubr.f32.mxu0 %v159
  %419 = vmatmul.mubr.f32.gmra.mrb[0].mxu0 %v21
  %v420 = vpop.f32.mrb[0].mxu0
  %v421 = vadd.f32 0.0, %v420
  %v422 = vpop.f32.mrb[0].mxu0
  %v423 = vadd.f32 0.0, %v422
  %424 = vmatprep.mubr.f32.mxu0 %v162
  %425 = vmatmul.mubr.f32.gmra.mrb[0].mxu0 %v23
  %v426 = vpop.f32.mrb[0].mxu0
  %v427 = vadd.f32 0.0, %v426
  %v428 = vpop.f32.mrb[0].mxu0
  %v429 = vadd.f32 0.0, %v428
  %430 = vdwg.mxu0
  %431 = vmatprep.subr.mxu0 0.0
  %432 = vmatpush1.msra.mxu0 %v31
  %433 = vmatprep.subr.mxu0 0.0
  %434 = vmatpush1.msra.mxu0 %v38
  %435 = vmatprep.subr.mxu0 0.0
  %436 = vmatpush1.msra.mxu0 %v45
  %437 = vmatprep.subr.mxu0 0.0
  %438 = vmatpush1.msra.mxu0 %v52
  %439 = vmatprep.subr.mxu0 0.0
  %440 = vmatpush1.msra.mxu0 %v59
  %441 = vmatprep.subr.mxu0 0.0
  %442 = vmatpush1.msra.mxu0 %v66
  %443 = vmatprep.subr.mxu0 0.0
  %444 = vmatpush1.msra.mxu0 %v73
  %445 = vmatprep.subr.mxu0 0.0
  %446 = vmatpush1.msra.mxu0 %v80
  %447 = vmatprep.subr.mxu0 0.0
  %448 = vmatpush1.msra.mxu0 %v87
  %449 = vmatprep.subr.mxu0 0.0
  %450 = vmatpush1.msra.mxu0 %v94
  %451 = vmatprep.subr.mxu0 0.0
  %452 = vmatpush1.msra.mxu0 %v101
  %453 = vmatprep.subr.mxu0 0.0
  %454 = vmatpush1.msra.mxu0 %v108
  %455 = vmatprep.subr.mxu0 0.0
  %456 = vmatpush1.msra.mxu0 %v115
  %457 = vmatprep.subr.mxu0 0.0
  %458 = vmatpush1.msra.mxu0 %v122
  %459 = vmatprep.subr.mxu0 0.0
  %460 = vmatpush1.msra.mxu0 %v129
  %461 = vmatprep.subr.mxu0 0.0
  %462 = vmatpush1.msra.mxu0 %v136
  %463 = vmatprep.subr.mxu0 0.0
  %464 = vmatpush1.msra.mxu0 %v143
  %465 = vmatprep.subr.mxu0 0.0
  %466 = vmatpush1.msra.mxu0 %v150
  %467 = vmatprep.subr.mxu0 0.0
  %468 = vmatpush1.msra.mxu0 0.0
  %469 = vmatprep.subr.mxu0 0.0
  %470 = vmatpush1.msra.mxu0 0.0
  %471 = vmatprep.subr.mxu0 0.0
  %472 = vmatpush1.msra.mxu0 0.0
  %473 = vmatprep.subr.mxu0 0.0
  %474 = vmatpush1.msra.mxu0 0.0
  %475 = vmatprep.subr.mxu0 0.0
  %476 = vmatpush1.msra.mxu0 0.0
  %477 = vmatprep.subr.mxu0 0.0
  %478 = vmatpush1.msra.mxu0 0.0
  %479 = vmatprep.subr.mxu0 0.0
  %480 = vmatpush1.msra.mxu0 0.0
  %481 = vmatprep.subr.mxu0 0.0
  %482 = vmatpush1.msra.mxu0 0.0
  %483 = vmatprep.subr.mxu0 0.0
  %484 = vmatpush1.msra.mxu0 0.0
  %485 = vmatprep.subr.mxu0 0.0
  %486 = vmatpush1.msra.mxu0 0.0
  %487 = vmatprep.subr.mxu0 0.0
  %488 = vmatpush1.msra.mxu0 0.0
  %489 = vmatprep.subr.mxu0 0.0
  %490 = vmatpush1.msra.mxu0 0.0
  %491 = vmatprep.subr.mxu0 0.0
  %492 = vmatpush1.msra.mxu0 0.0
  %493 = vmatprep.subr.mxu0 0.0
  %494 = vmatpush1.msra.mxu0 0.0
  %495 = vmatprep.mubr.f32.mxu0 %v153
  %496 = vmatmul.mubr.f32.gmra.mrb[0].mxu0 %v17
  %v497 = vpop.f32.mrb[0].mxu0
  %v498 = vadd.f32 0.0, %v497
  %v499 = vpop.f32.mrb[0].mxu0
  %500 = vmatprep.mubr.f32.mxu0 %v156
  %501 = vmatmul.mubr.f32.gmra.mrb[0].mxu0 %v19
  %v502 = vpop.f32.mrb[0].mxu0
  %v503 = vadd.f32 0.0, %v502
  %v504 = vpop.f32.mrb[0].mxu0
  %505 = vmatprep.mubr.f32.mxu0 %v159
  %506 = vmatmul.mubr.f32.gmra.mrb[0].mxu0 %v21
  %v507 = vpop.f32.mrb[0].mxu0
  %v508 = vadd.f32 0.0, %v507
  %v509 = vpop.f32.mrb[0].mxu0
  %510 = vmatprep.mubr.f32.mxu0 %v162
  %511 = vmatmul.mubr.f32.gmra.mrb[0].mxu0 %v23
  %v512 = vpop.f32.mrb[0].mxu0
  %v513 = vadd.f32 0.0, %v512
  %v514 = vpop.f32.mrb[0].mxu0
  %515 = vdwg.mxu0
  %v516 = vadd.f32 %v231, %v233
  %v517 = vadd.f32 %v516, %v320
  %v518 = vadd.f32 %v517, %v322
  %v519 = vadd.f32 %v518, %v409
  %v520 = vadd.f32 %v519, %v411
  %v521 = vadd.f32 %v520, %v498
  %522 = vadd.xlane.f32.xlu0 %v521
  %v523 = vpop.xlane.xlu0 %522
  %v524 = vadd.f32 %v237, %v239
  %v525 = vadd.f32 %v524, %v326
  %v526 = vadd.f32 %v525, %v328
  %v527 = vadd.f32 %v526, %v415
  %v528 = vadd.f32 %v527, %v417
  %v529 = vadd.f32 %v528, %v503
  %530 = vadd.xlane.f32.xlu0 %v529
  %v531 = vpop.xlane.xlu0 %530
  %v532 = vadd.f32 %v243, %v245
  %v533 = vadd.f32 %v532, %v332
  %v534 = vadd.f32 %v533, %v334
  %v535 = vadd.f32 %v534, %v421
  %v536 = vadd.f32 %v535, %v423
  %v537 = vadd.f32 %v536, %v508
  %538 = vadd.xlane.f32.xlu0 %v537
  %v539 = vpop.xlane.xlu0 %538
  %v540 = vadd.f32 %v249, %v251
  %v541 = vadd.f32 %v540, %v338
  %v542 = vadd.f32 %v541, %v340
  %v543 = vadd.f32 %v542, %v427
  %v544 = vadd.f32 %v543, %v429
  %v545 = vadd.f32 %v544, %v513
  %546 = vadd.xlane.f32.xlu0 %v545
  %v547 = vpop.xlane.xlu0 %546
  %v548 = vmul.f32 %v231, %v231
  %v549 = vmul.f32 %v233, %v233
  %v550 = vmul.f32 %v320, %v320
  %v551 = vmul.f32 %v322, %v322
  %v552 = vmul.f32 %v409, %v409
  %v553 = vmul.f32 %v411, %v411
  %v554 = vmul.f32 %v498, %v498
  %v555 = vmul.f32 %v237, %v237
  %v556 = vmul.f32 %v239, %v239
  %v557 = vmul.f32 %v326, %v326
  %v558 = vmul.f32 %v328, %v328
  %v559 = vmul.f32 %v415, %v415
  %v560 = vmul.f32 %v417, %v417
  %v561 = vmul.f32 %v503, %v503
  %v562 = vmul.f32 %v243, %v243
  %v563 = vmul.f32 %v245, %v245
  %v564 = vmul.f32 %v332, %v332
  %v565 = vmul.f32 %v334, %v334
  %v566 = vmul.f32 %v421, %v421
  %v567 = vmul.f32 %v423, %v423
  %v568 = vmul.f32 %v508, %v508
  %v569 = vmul.f32 %v249, %v249
  %v570 = vmul.f32 %v251, %v251
  %v571 = vmul.f32 %v338, %v338
  %v572 = vmul.f32 %v340, %v340
  %v573 = vmul.f32 %v427, %v427
  %v574 = vmul.f32 %v429, %v429
  %v575 = vmul.f32 %v513, %v513
  %v576 = vadd.f32 %v548, %v549
  %v577 = vadd.f32 %v576, %v550
  %v578 = vadd.f32 %v577, %v551
  %v579 = vadd.f32 %v578, %v552
  %v580 = vadd.f32 %v579, %v553
  %v581 = vadd.f32 %v580, %v554
  %582 = vadd.xlane.f32.xlu0 %v581
  %v583 = vpop.xlane.xlu0 %582
  %v584 = vadd.f32 %v555, %v556
  %v585 = vadd.f32 %v584, %v557
  %v586 = vadd.f32 %v585, %v558
  %v587 = vadd.f32 %v586, %v559
  %v588 = vadd.f32 %v587, %v560
  %v589 = vadd.f32 %v588, %v561
  %590 = vadd.xlane.f32.xlu0 %v589
  %v591 = vpop.xlane.xlu0 %590
  %v592 = vadd.f32 %v562, %v563
  %v593 = vadd.f32 %v592, %v564
  %v594 = vadd.f32 %v593, %v565
  %v595 = vadd.f32 %v594, %v566
  %v596 = vadd.f32 %v595, %v567
  %v597 = vadd.f32 %v596, %v568
  %598 = vadd.xlane.f32.xlu0 %v597
  %v599 = vpop.xlane.xlu0 %598
  %v600 = vadd.f32 %v569, %v570
  %v601 = vadd.f32 %v600, %v571
  %v602 = vadd.f32 %v601, %v572
  %v603 = vadd.f32 %v602, %v573
  %v604 = vadd.f32 %v603, %v574
  %v605 = vadd.f32 %v604, %v575
  %606 = vadd.xlane.f32.xlu0 %v605
  %v607 = vpop.xlane.xlu0 %606
  %v608 = vmul.f32 %v523, 0.0012755102
  %v609 = vmul.f32 %v531, 0.0012755102
  %v610 = vmul.f32 %v539, 0.0012755102
  %v611 = vmul.f32 %v547, 0.0012755102
  %v612 = vmul.f32 %v583, 0.0012755102
  %v613 = vmul.f32 %v591, 0.0012755102
  %v614 = vmul.f32 %v599, 0.0012755102
  %v615 = vmul.f32 %v607, 0.0012755102
  %v616 = vmul.f32 %v608, %v608
  %v617 = vmul.f32 %v609, %v609
  %v618 = vmul.f32 %v610, %v610
  %v619 = vmul.f32 %v611, %v611
  %v620 = vsub.f32 %v612, %v616
  %v621 = vsub.f32 %v613, %v617
  %v622 = vsub.f32 %v614, %v618
  %v623 = vsub.f32 %v615, %v619
  %v624 = vadd.f32 %v620, 0.001
  %v625 = vadd.f32 %v621, 0.001
  %v626 = vadd.f32 %v622, 0.001
  %v627 = vadd.f32 %v623, 0.001
  %v628 = vrsqrt.pop %v624
  %v629 = vrsqrt.pop %v625
  %v630 = vrsqrt.pop %v626
  %v631 = vrsqrt.pop %v627
  %v632 = vld [vmem:[%s2] sm:$0xff]
  %v633 = vld [vmem:[%s2 + $0x8] sm:$0xff]
  %v634 = vld [vmem:[%s2 + $0x10] sm:$0xff]
  %v635 = vld [vmem:[%s2 + $0x18] sm:$0xff]
  %v636 = vmul.f32 %v632, %v628
  %v637 = vmul.f32 %v633, %v629
  %v638 = vmul.f32 %v634, %v630
  %v639 = vmul.f32 %v635, %v631
  %v640 = vld [vmem:[%s3] sm:$0xff]
  %v641 = vld [vmem:[%s3 + $0x8] sm:$0xff]
  %v642 = vld [vmem:[%s3 + $0x10] sm:$0xff]
  %v643 = vld [vmem:[%s3 + $0x18] sm:$0xff]
  %v644 = vmul.f32 %v608, %v636
  %v645 = vmul.f32 %v609, %v637
  %v646 = vmul.f32 %v610, %v638
  %v647 = vmul.f32 %v611, %v639
  %v648 = vsub.f32 %v640, %v644
  %v649 = vsub.f32 %v641, %v645
  %v650 = vsub.f32 %v642, %v646
  %v651 = vsub.f32 %v643, %v647
  %653 = vset.pattern.permute.xlu0 0
  %654 = vperm.xlu0 %653, %v636
  %v655 = vpop.permute.xlu0 %654
  %658 = vset.pattern.permute.xlu0 0
  %659 = vperm.xlu0 %658, %v637
  %v660 = vpop.permute.xlu0 %659
  %663 = vset.pattern.permute.xlu0 0
  %664 = vperm.xlu0 %663, %v638
  %v665 = vpop.permute.xlu0 %664
  %668 = vset.pattern.permute.xlu0 0
  %669 = vperm.xlu0 %668, %v639
  %v670 = vpop.permute.xlu0 %669
  %v672 = vmul.f32 %v231, %v655
  %v673 = vmul.f32 %v233, %v655
  %v674 = vmul.f32 %v320, %v655
  %v675 = vmul.f32 %v322, %v655
  %v676 = vmul.f32 %v409, %v655
  %v677 = vmul.f32 %v411, %v655
  %v678 = vmul.f32 %v498, %v655
  %v679 = vmul.f32 %v237, %v660
  %v680 = vmul.f32 %v239, %v660
  %v681 = vmul.f32 %v326, %v660
  %v682 = vmul.f32 %v328, %v660
  %v683 = vmul.f32 %v415, %v660
  %v684 = vmul.f32 %v417, %v660
  %v685 = vmul.f32 %v503, %v660
  %v686 = vmul.f32 %v243, %v665
  %v687 = vmul.f32 %v245, %v665
  %v688 = vmul.f32 %v332, %v665
  %v689 = vmul.f32 %v334, %v665
  %v690 = vmul.f32 %v421, %v665
  %v691 = vmul.f32 %v423, %v665
  %v692 = vmul.f32 %v508, %v665
  %v693 = vmul.f32 %v249, %v670
  %v694 = vmul.f32 %v251, %v670
  %v695 = vmul.f32 %v338, %v670
  %v696 = vmul.f32 %v340, %v670
  %v697 = vmul.f32 %v427, %v670
  %v698 = vmul.f32 %v429, %v670
  %v699 = vmul.f32 %v513, %v670
  %701 = vset.pattern.permute.xlu0 0
  %702 = vperm.xlu0 %701, %v648
  %v703 = vpop.permute.xlu0 %702
  %706 = vset.pattern.permute.xlu0 0
  %707 = vperm.xlu0 %706, %v649
  %v708 = vpop.permute.xlu0 %707
  %711 = vset.pattern.permute.xlu0 0
  %712 = vperm.xlu0 %711, %v650
  %v713 = vpop.permute.xlu0 %712
  %716 = vset.pattern.permute.xlu0 0
  %717 = vperm.xlu0 %716, %v651
  %v718 = vpop.permute.xlu0 %717
  %v720 = vadd.f32 %v672, %v703
  %v721 = vadd.f32 %v673, %v703
  %v722 = vadd.f32 %v674, %v703
  %v723 = vadd.f32 %v675, %v703
  %v724 = vadd.f32 %v676, %v703
  %v725 = vadd.f32 %v677, %v703
  %v726 = vadd.f32 %v678, %v703
  %v727 = vadd.f32 %v679, %v708
  %v728 = vadd.f32 %v680, %v708
  %v729 = vadd.f32 %v681, %v708
  %v730 = vadd.f32 %v682, %v708
  %v731 = vadd.f32 %v683, %v708
  %v732 = vadd.f32 %v684, %v708
  %v733 = vadd.f32 %v685, %v708
  %v734 = vadd.f32 %v686, %v713
  %v735 = vadd.f32 %v687, %v713
  %v736 = vadd.f32 %v688, %v713
  %v737 = vadd.f32 %v689, %v713
  %v738 = vadd.f32 %v690, %v713
  %v739 = vadd.f32 %v691, %v713
  %v740 = vadd.f32 %v692, %v713
  %v741 = vadd.f32 %v693, %v718
  %v742 = vadd.f32 %v694, %v718
  %v743 = vadd.f32 %v695, %v718
  %v744 = vadd.f32 %v696, %v718
  %v745 = vadd.f32 %v697, %v718
  %v746 = vadd.f32 %v698, %v718
  %v747 = vadd.f32 %v699, %v718
  %v748 = vmax.f32 %v720, 0.0
  %v749 = vmax.f32 %v721, 0.0
  %v750 = vmax.f32 %v722, 0.0
  %v751 = vmax.f32 %v723, 0.0
  %v752 = vmax.f32 %v724, 0.0
  %v753 = vmax.f32 %v725, 0.0
  %v754 = vmax.f32 %v726, 0.0
  %v755 = vmax.f32 %v727, 0.0
  %v756 = vmax.f32 %v728, 0.0
  %v757 = vmax.f32 %v729, 0.0
  %v758 = vmax.f32 %v730, 0.0
  %v759 = vmax.f32 %v731, 0.0
  %v760 = vmax.f32 %v732, 0.0
  %v761 = vmax.f32 %v733, 0.0
  %v762 = vmax.f32 %v734, 0.0
  %v763 = vmax.f32 %v735, 0.0
  %v764 = vmax.f32 %v736, 0.0
  %v765 = vmax.f32 %v737, 0.0
  %v766 = vmax.f32 %v738, 0.0
  %v767 = vmax.f32 %v739, 0.0
  %v768 = vmax.f32 %v740, 0.0
  %v769 = vmax.f32 %v741, 0.0
  %v770 = vmax.f32 %v742, 0.0
  %v771 = vmax.f32 %v743, 0.0
  %v772 = vmax.f32 %v744, 0.0
  %v773 = vmax.f32 %v745, 0.0
  %v774 = vmax.f32 %v746, 0.0
  %v775 = vmax.f32 %v747, 0.0
  %776 = vst [vmem:[%s4] sm:$0xff] %v748
  %777 = vst [vmem:[%s4 + $0x8] sm:$0xff] %v749
  %778 = vst [vmem:[%s4 + $0x10] sm:$0xff] %v750
  %779 = vst [vmem:[%s4 + $0x18] sm:$0xff] %v751
  %780 = vst [vmem:[%s4 + $0x20] sm:$0xff] %v752
  %781 = vst [vmem:[%s4 + $0x28] sm:$0xff] %v753
  %782 = vst [vmem:[%s4 + $0x30] sm:$0xff] %v754
  %783 = vst [vmem:[%s4 + $0x38] sm:$0xff] %v755
  %784 = vst [vmem:[%s4 + $0x40] sm:$0xff] %v756
  %785 = vst [vmem:[%s4 + $0x48] sm:$0xff] %v757
  %786 = vst [vmem:[%s4 + $0x50] sm:$0xff] %v758
  %787 = vst [vmem:[%s4 + $0x58] sm:$0xff] %v759
  %788 = vst [vmem:[%s4 + $0x60] sm:$0xff] %v760
  %789 = vst [vmem:[%s4 + $0x68] sm:$0xff] %v761
  %790 = vst [vmem:[%s4 + $0x70] sm:$0xff] %v762
  %791 = vst [vmem:[%s4 + $0x78] sm:$0xff] %v763
  %792 = vst [vmem:[%s4 + $0x80] sm:$0xff] %v764
  %793 = vst [vmem:[%s4 + $0x88] sm:$0xff] %v765
  %794 = vst [vmem:[%s4 + $0x90] sm:$0xff] %v766
  %795 = vst [vmem:[%s4 + $0x98] sm:$0xff] %v767
  %796 = vst [vmem:[%s4 + $0xa0] sm:$0xff] %v768
  %797 = vst [vmem:[%s4 + $0xa8] sm:$0xff] %v769
  %798 = vst [vmem:[%s4 + $0xb0] sm:$0xff] %v770
  %799 = vst [vmem:[%s4 + $0xb8] sm:$0xff] %v771
  %800 = vst [vmem:[%s4 + $0xc0] sm:$0xff] %v772
  %801 = vst [vmem:[%s4 + $0xc8] sm:$0xff] %v773
  %802 = vst [vmem:[%s4 + $0xd0] sm:$0xff] %v774
  %803 = vst [vmem:[%s4 + $0xd8] sm:$0xff] %v775
  // Predicated region
  $region18: #{conv_bn_relu.1} parent=0 // pred_check
    _
  $region19: #{conv_bn_relu.1} parent=0 // pred_check_branch
    %805 = sbr.rel (0) target = $region21
  $region20: #{conv_bn_relu.1} parent=0 // pred_region
    _
  $region21: #{conv_bn_relu.1} parent=0 // pred_fallthru
    _
  // Predicated region
  $region22: #{conv_bn_relu.1} parent=0 // pred_check
    _
  $region23: #{conv_bn_relu.1} parent=0 // pred_check_branch
    %807 = sbr.rel (0) target = $region25
  $region24: #{conv_bn_relu.1} parent=0 // pred_region
    _
  $region25: #{conv_bn_relu.1} parent=0 // pred_fallthru
    _

</llo_original>
